<compile_context>
chip_gen: v6e
topology: v6e:2x2x1
jax: 0.10.0
libtpu: 0.0.40
codegen_flags: <defaults>
</compile_context>

<pallas_src>
import functools

import jax
import jax.numpy as jnp
from jax import lax
from jax.experimental import pallas as pl
from jax.experimental.pallas import tpu as pltpu

_UNROLL = 8  # inner edge-loop unroll factor (tile_e is always a multiple of 8)


def _round_up(x: int, m: int) -> int:
    return ((x + m - 1) // m) * m


def _pad2(a, rows, cols):
    return jnp.pad(a, ((0, rows - a.shape[0]), (0, cols - a.shape[1])))


# ---------------------------------------------------------------------------
# Kernel A: fused edge-linear + gather + message + scatter-sum (aggregation).
# Grid: edge tiles (reduction).  x / We / be stay VMEM-resident (constant
# index_maps); edge_attr tiles are double-buffered; aggr lives in VMEM scratch
# (with 8 trailing trash rows that absorb padded edges -> no per-edge mask).
# ---------------------------------------------------------------------------
def _gine_aggregate_kernel(src_ref, tgt_ref,               # scalar prefetch (SMEM)
                           x_ref, ea_ref, we_ref, be_ref,  # inputs (VMEM)
                           h_ref,                          # output (VMEM, bf16)
                           e_scr, aggr_scr,                # scratch (VMEM)
                           *, tile_e, n_rows):
    i = pl.program_id(0)

    @pl.when(i == 0)
    def _init():
        aggr_scr[...] = jnp.zeros_like(aggr_scr)

    # Edge linear for this edge tile, fused in-kernel:
    #   e = edge_attr @ We + be    (bf16 MXU inputs, f32 accumulation)
    e_scr[...] = jnp.dot(ea_ref[...], we_ref[...],
                         preferred_element_type=jnp.float32) + be_ref[...]

    base = i * tile_e

    def body(j, carry):
        # 8-wide manual unroll: gathers / adds of different edges can overlap;
        # only the accumulator RMWs are serialised (ref program order).
        for u in range(_UNROLL):
            idx = base + j * _UNROLL + u
            s = src_ref[idx]
            t = tgt_ref[idx]                       # padded edges point at a trash row
            xj = x_ref[pl.ds(s, 1), :]             # [1, c_in_p] dynamic row gather
            m = jnp.maximum(xj + e_scr[pl.ds(j * _UNROLL + u, 1), :], 0.0)
            aggr_scr[pl.ds(t, 1), :] = aggr_scr[pl.ds(t, 1), :] + m
        return carry

    lax.fori_loop(0, tile_e // _UNROLL, body, 0)

    @pl.when(i == pl.num_programs(0) - 1)
    def _finalize():
        # (1 + eps) * x with eps == 0  ->  just x  (dead multiply removed).
        # Store bf16: h is the bf16 MXU input of the MLP kernel anyway.
        h_ref[...] = (x_ref[...] + aggr_scr[pl.ds(0, n_rows), :]).astype(h_ref.dtype)


# ---------------------------------------------------------------------------
# Kernel B: node-wise MLP  Linear(c_in, 2c_out) -> ReLU -> Linear(2c_out, c_out)
# Grid: node tiles ("parallel" -> shards over v7x's 2 TCs); weights resident.
# ---------------------------------------------------------------------------
def _gine_mlp_kernel(h_ref, w1_ref, b1_ref, w2_ref, b2_ref, out_ref):
    h1 = jnp.maximum(
        jnp.dot(h_ref[...], w1_ref[...],
                preferred_element_type=jnp.float32) + b1_ref[...], 0.0)
    out_ref[...] = jnp.dot(h1.astype(jnp.bfloat16), w2_ref[...],
                           preferred_element_type=jnp.float32) + b2_ref[...]


def gine_conv(node_feats, edge_index, edge_attr, params):
    """node_feats: [N, c_in] f32, edge_index: [2, E] i32, edge_attr: [E, ed] f32 or None."""
    N, c_in = node_feats.shape
    E = int(edge_index.shape[1])

    if edge_attr is None:
        # PyTorch branch: edge_attr = zeros(E, c_in); the edge linear is NOT applied.
        edge_attr = jnp.zeros((E, c_in), dtype=jnp.float32)
        we = jnp.eye(c_in, dtype=jnp.float32)
        be = jnp.zeros((1, c_in), dtype=jnp.float32)
    else:
        we, be = params["we"], params["be"]
    edge_dim = edge_attr.shape[1]

    w1, b1, w2, b2 = params["w1"], params["b1"], params["w2"], params["b2"]
    hidden = w1.shape[1]
    c_out = w2.shape[1]

    # ---- lane-dense padded sizes (all feature dims -> multiples of 128) ----
    c_in_p = _round_up(c_in, 128)
    ed_p = _round_up(edge_dim, 128)
    hid_p = _round_up(hidden, 128)
    c_out_p = _round_up(c_out, 128)

    tile_n = min(256, _round_up(N, 8))          # node tile (MLP, "parallel")
    n_p = _round_up(N, tile_n)
    tile_e = min(512, _round_up(E, 8))          # edge tile (reduction axis)
    e_p = _round_up(E, tile_e)

    f32, bf16, i32 = jnp.float32, jnp.bfloat16, jnp.int32
    x_p = _pad2(node_feats.astype(f32), n_p, c_in_p)
    ea_p = _pad2(edge_attr.astype(f32), e_p, ed_p).astype(bf16)     # bf16 on host
    we_p = _pad2(we.astype(f32), ed_p, c_in_p).astype(bf16)
    be_p = _pad2(be.astype(f32), 1, c_in_p)
    w1_p = _pad2(w1.astype(f32), c_in_p, hid_p).astype(bf16)
    b1_p = _pad2(b1.astype(f32), 1, hid_p)
    w2_p = _pad2(w2.astype(f32), hid_p, c_out_p).astype(bf16)
    b2_p = _pad2(b2.astype(f32), 1, c_out_p)

    # Padded edges: src -> row 0 (valid), tgt -> trash row n_p (never read back).
    src = jnp.pad(edge_index[0].astype(i32), (0, e_p - E))
    tgt = jnp.pad(edge_index[1].astype(i32), (0, e_p - E), constant_values=n_p)

    # VMEM budget (f32): x + aggr ~= 2*n_p*c_in_p*4, bf16 h out, bf16 edge
    # tiles (2-buf) + e scratch, plus tiny weights — well under the 32 MiB
    # scoped limit for the sizes this whole-x-resident design targets.
    vmem_limit = 32 * 1024 * 1024

    agg_cost = pl.CostEstimate(
        flops=2 * e_p * ed_p * c_in_p + 3 * E * c_in_p,
        transcendentals=0,
        bytes_accessed=4 * n_p * c_in_p + 2 * n_p * c_in_p
        + 2 * e_p * ed_p + 2 * ed_p * c_in_p + 8 * e_p)

    h = pl.pallas_call(
        functools.partial(_gine_aggregate_kernel, tile_e=tile_e, n_rows=n_p),
        out_shape=jax.ShapeDtypeStruct((n_p, c_in_p), bf16),
        grid_spec=pltpu.PrefetchScalarGridSpec(
            num_scalar_prefetch=2,                    # src, tgt -> SMEM
            grid=(e_p // tile_e,),
            in_specs=[
                pl.BlockSpec((n_p, c_in_p), lambda i, s, t: (0, 0)),    # x (resident)
                pl.BlockSpec((tile_e, ed_p), lambda i, s, t: (i, 0)),   # edge_attr tile
                pl.BlockSpec((ed_p, c_in_p), lambda i, s, t: (0, 0)),   # We (resident)
                pl.BlockSpec((1, c_in_p), lambda i, s, t: (0, 0)),      # be (resident)
            ],
            out_specs=pl.BlockSpec((n_p, c_in_p), lambda i, s, t: (0, 0)),
            scratch_shapes=[
                pltpu.VMEM((tile_e, c_in_p), f32),        # projected edge features
                pltpu.VMEM((n_p + 8, c_in_p), f32),       # aggr (+8 trash rows)
            ]),
        compiler_params=pltpu.CompilerParams(
            dimension_semantics=("arbitrary",),       # edge axis is a reduction
            vmem_limit_bytes=vmem_limit),
        cost_estimate=agg_cost,
    )(src, tgt, x_p, ea_p, we_p, be_p)

    mlp_cost = pl.CostEstimate(
        flops=2 * n_p * c_in_p * hid_p + 2 * n_p * hid_p * c_out_p,
        transcendentals=0,
        bytes_accessed=2 * n_p * c_in_p + 4 * n_p * c_out_p
        + 2 * (c_in_p * hid_p + hid_p * c_out_p))

    out = pl.pallas_call(
        _gine_mlp_kernel,
        out_shape=jax.ShapeDtypeStruct((n_p, c_out_p), f32),
        grid=(n_p // tile_n,),
        in_specs=[
            pl.BlockSpec((tile_n, c_in_p), lambda i: (i, 0)),   # h tile (bf16)
            pl.BlockSpec((c_in_p, hid_p), lambda i: (0, 0)),    # W1 (resident)
            pl.BlockSpec((1, hid_p), lambda i: (0, 0)),         # b1 (resident)
            pl.BlockSpec((hid_p, c_out_p), lambda i: (0, 0)),   # W2 (resident)
            pl.BlockSpec((1, c_out_p), lambda i: (0, 0)),       # b2 (resident)
        ],
        out_specs=pl.BlockSpec((tile_n, c_out_p), lambda i: (i, 0)),
        compiler_params=pltpu.CompilerParams(
            dimension_semantics=("parallel",),        # 2 TCs on v7x
            vmem_limit_bytes=vmem_limit),
        cost_estimate=mlp_cost,
    )(h, w1_p, b1_p, w2_p, b2_p)

    return out[:N, :c_out]


def gine_conv_ref(node_feats, edge_index, edge_attr, params):
    """Plain-JAX reference with the same bf16-input / f32-accumulate matmuls."""
    bf16 = jnp.bfloat16
    if edge_attr is None:
        e = jnp.zeros((edge_index.shape[1], node_feats.shape[1]), jnp.float32)
    else:
        e = jnp.dot(edge_attr.astype(bf16), params["we"].astype(bf16),
                    preferred_element_type=jnp.float32) + params["be"]
    xj = node_feats[edge_index[0]]
    m = jax.nn.relu(xj + e)
    aggr = jnp.zeros_like(node_feats).at[edge_index[1]].add(m)
    h = node_feats + aggr
    h1 = jax.nn.relu(jnp.dot(h.astype(bf16), params["w1"].astype(bf16),
                             preferred_element_type=jnp.float32) + params["b1"])
    return jnp.dot(h1.astype(bf16), params["w2"].astype(bf16),
                   preferred_element_type=jnp.float32) + params["b2"]


if __name__ == "__main__":
    key = jax.random.PRNGKey(0)
    N, E = 16, 40
    c_in, c_out, edge_dim = 32, 32, 8

    ks = jax.random.split(key, 10)
    node_feats = jax.random.normal(ks[0], (N, c_in), dtype=jnp.float32)
    edge_attr = jax.random.normal(ks[1], (E, edge_dim), dtype=jnp.float32)
    src = jax.random.randint(ks[2], (E,), 0, N, dtype=jnp.int32)
    tgt = jax.random.randint(ks[3], (E,), 0, N, dtype=jnp.int32)
    edge_index = jnp.stack([src, tgt], axis=0)

    # Deterministic parameter init (weights stored [in, out] = torch weight.T)
    def lin_init(kw, kb, fan_in, fan_out):
        bound = 1.0 / (fan_in ** 0.5)
        w = jax.random.uniform(kw, (fan_in, fan_out), jnp.float32, -bound, bound)
        b = jax.random.uniform(kb, (1, fan_out), jnp.float32, -bound, bound)
        return w, b

    we, be = lin_init(ks[4], ks[5], edge_dim, c_in)          # self.edge
    w1, b1 = lin_init(ks[6], ks[7], c_in, 2 * c_out)         # mlp[0]
    w2, b2 = lin_init(ks[8], ks[9], 2 * c_out, c_out)        # mlp[2]
    params = {"we": we, "be": be, "w1": w1, "b1": b1, "w2": w2, "b2": b2}

    out = jax.block_until_ready(gine_conv(node_feats, edge_index, edge_attr, params))
    ref = gine_conv_ref(node_feats, edge_index, edge_attr, params)
    assert out.shape == (N, c_out)
    err = float(jnp.max(jnp.abs(out - ref)))
    assert jnp.allclose(out, ref, atol=2e-3, rtol=2e-3), err

    # also exercise the edge_attr=None branch
    out_none = jax.block_until_ready(gine_conv(node_feats, edge_index, None, params))
    ref_none = gine_conv_ref(node_feats, edge_index, None, params)
    assert jnp.allclose(out_none, ref_none, atol=2e-3, rtol=2e-3)

    print("KERNEL_OK")
</pallas_src>

<mosaic_0001>
module attributes {stable_mosaic.version = 11 : i64} {
  func.func @_gine_aggregate_kernel(%arg0: i32, %arg1: memref<40xi32, #tpu.memory_space<smem>>, %arg2: memref<40xi32, #tpu.memory_space<smem>>, %arg3: memref<16x128xf32, #tpu.memory_space<vmem>>, %arg4: memref<40x128xbf16, #tpu.memory_space<vmem>>, %arg5: memref<128x128xbf16, #tpu.memory_space<vmem>>, %arg6: memref<1x128xf32, #tpu.memory_space<vmem>>, %arg7: memref<16x128xbf16, #tpu.memory_space<vmem>>, %arg8: memref<40x128xf32, #tpu.memory_space<vmem>>, %arg9: memref<24x128xf32, #tpu.memory_space<vmem>>) attributes {dimension_semantics = [#tpu.dimension_semantics<arbitrary>], iteration_bounds = array<i64: 1>, scalar_prefetch = 2 : i64, scratch_operands = 2 : i64, tpu.core_type = #tpu.core_type<tc>, window_params = [{pipeline_mode = #tpu.pipeline_mode<synchronous>, transform_indices = @transform_0, window_bounds = array<i64: 16, 128>}, {transform_indices = @transform_1, window_bounds = array<i64: 40, 128>}, {pipeline_mode = #tpu.pipeline_mode<synchronous>, transform_indices = @transform_2, window_bounds = array<i64: 128, 128>}, {pipeline_mode = #tpu.pipeline_mode<synchronous>, transform_indices = @transform_3, window_bounds = array<i64: 1, 128>}, {pipeline_mode = #tpu.pipeline_mode<synchronous>, transform_indices = @transform_4, window_bounds = array<i64: 16, 128>}]} {
    %c0_i32 = arith.constant 0 : i32
    %0 = arith.cmpi eq, %arg0, %c0_i32 : i32
    %1 = arith.extui %0 : i1 to i32
    %c0_i32_0 = arith.constant 0 : i32
    %2 = arith.cmpi ne, %1, %c0_i32_0 : i32
    scf.if %2 {
      %cst_12 = arith.constant 0.000000e+00 : f32
      %15 = vector.broadcast %cst_12 : f32 to vector<24x128xf32>
      %c0_13 = arith.constant 0 : index
      %c0_14 = arith.constant 0 : index
      %16 = vector.load %arg9[%c0_13, %c0_14] : memref<24x128xf32, #tpu.memory_space<vmem>>, vector<24x128xf32>
      tpu.vector_store %arg9[%c0_13, %c0_14], %15 {strides = array<i32>} : memref<24x128xf32, #tpu.memory_space<vmem>>, vector<24x128xf32>,
    } else {
    }
    %c0 = arith.constant 0 : index
    %c0_1 = arith.constant 0 : index
    %3 = vector.load %arg4[%c0, %c0_1] : memref<40x128xbf16, #tpu.memory_space<vmem>>, vector<40x128xbf16>
    %c0_2 = arith.constant 0 : index
    %c0_3 = arith.constant 0 : index
    %4 = vector.load %arg5[%c0_2, %c0_3] : memref<128x128xbf16, #tpu.memory_space<vmem>>, vector<128x128xbf16>
    %cst = arith.constant dense<0.000000e+00> : vector<40x128xf32>
    %5 = tpu.matmul %3, %4, %cst {dimension_numbers = #tpu.dot_dimension_numbers<[1], [0], [0], [1], [0, 0, 1, 1], [], []>} : vector<40x128xbf16>, vector<128x128xbf16>, vector<40x128xf32> -> vector<40x128xf32>
    %c0_4 = arith.constant 0 : index
    %c0_5 = arith.constant 0 : index
    %6 = vector.load %arg6[%c0_4, %c0_5] : memref<1x128xf32, #tpu.memory_space<vmem>>, vector<1x128xf32>
    %7 = vector.broadcast %6 : vector<1x128xf32> to vector<40x128xf32>
    %8 = arith.addf %5, %7 : vector<40x128xf32>
    %c0_6 = arith.constant 0 : index
    %c0_7 = arith.constant 0 : index
    %9 = vector.load %arg8[%c0_6, %c0_7] : memref<40x128xf32, #tpu.memory_space<vmem>>, vector<40x128xf32>
    tpu.vector_store %arg8[%c0_6, %c0_7], %8 {strides = array<i32>} : memref<40x128xf32, #tpu.memory_space<vmem>>, vector<40x128xf32>,
    %c40_i32 = arith.constant 40 : i32
    %10 = arith.muli %arg0, %c40_i32 : i32
    %c0_i32_8 = arith.constant 0 : i32
    %c5_i32 = arith.constant 5 : i32
    %11 = arith.addi %c0_i32_8, %c5_i32 : i32
    %c1_i32 = arith.constant 1 : i32
    scf.for %arg10 = %c0_i32_8 to %11 step %c1_i32  : i32 {
      %c8_i32 = arith.constant 8 : i32
      %15 = arith.muli %arg10, %c8_i32 : i32
      %16 = arith.addi %10, %15 : i32
      %c0_i32_12 = arith.constant 0 : i32
      %17 = arith.addi %16, %c0_i32_12 : i32
      %18 = arith.index_cast %17 : i32 to index
      %19 = memref.load %arg1[%18] : memref<40xi32, #tpu.memory_space<smem>>
      %20 = arith.index_cast %17 : i32 to index
      %21 = memref.load %arg2[%20] : memref<40xi32, #tpu.memory_space<smem>>
      %22 = arith.index_cast %19 : i32 to index
      %c0_13 = arith.constant 0 : index
      %23 = vector.load %arg3[%22, %c0_13] : memref<16x128xf32, #tpu.memory_space<vmem>>, vector<1x128xf32>
      %c8_i32_14 = arith.constant 8 : i32
      %24 = arith.muli %arg10, %c8_i32_14 : i32
      %c0_i32_15 = arith.constant 0 : i32
      %25 = arith.addi %24, %c0_i32_15 : i32
      %26 = arith.index_cast %25 : i32 to index
      %c0_16 = arith.constant 0 : index
      %27 = vector.load %arg8[%26, %c0_16] : memref<40x128xf32, #tpu.memory_space<vmem>>, vector<1x128xf32>
      %28 = arith.addf %23, %27 : vector<1x128xf32>
      %cst_17 = arith.constant 0.000000e+00 : f32
      %29 = vector.broadcast %cst_17 : f32 to vector<1x128xf32>
      %30 = arith.maximumf %28, %29 : vector<1x128xf32>
      %31 = arith.index_cast %21 : i32 to index
      %c0_18 = arith.constant 0 : index
      %32 = vector.load %arg9[%31, %c0_18] : memref<24x128xf32, #tpu.memory_space<vmem>>, vector<1x128xf32>
      %33 = arith.addf %32, %30 : vector<1x128xf32>
      %34 = arith.index_cast %21 : i32 to index
      %c0_19 = arith.constant 0 : index
      %35 = vector.load %arg9[%34, %c0_19] : memref<24x128xf32, #tpu.memory_space<vmem>>, vector<1x128xf32>
      tpu.vector_store %arg9[%34, %c0_19], %33 {strides = array<i32>} : memref<24x128xf32, #tpu.memory_space<vmem>>, vector<1x128xf32>,
      %c8_i32_20 = arith.constant 8 : i32
      %36 = arith.muli %arg10, %c8_i32_20 : i32
      %37 = arith.addi %10, %36 : i32
      %c1_i32_21 = arith.constant 1 : i32
      %38 = arith.addi %37, %c1_i32_21 : i32
      %39 = arith.index_cast %38 : i32 to index
      %40 = memref.load %arg1[%39] : memref<40xi32, #tpu.memory_space<smem>>
      %41 = arith.index_cast %38 : i32 to index
      %42 = memref.load %arg2[%41] : memref<40xi32, #tpu.memory_space<smem>>
      %43 = arith.index_cast %40 : i32 to index
      %c0_22 = arith.constant 0 : index
      %44 = vector.load %arg3[%43, %c0_22] : memref<16x128xf32, #tpu.memory_space<vmem>>, vector<1x128xf32>
      %c8_i32_23 = arith.constant 8 : i32
      %45 = arith.muli %arg10, %c8_i32_23 : i32
      %c1_i32_24 = arith.constant 1 : i32
      %46 = arith.addi %45, %c1_i32_24 : i32
      %47 = arith.index_cast %46 : i32 to index
      %c0_25 = arith.constant 0 : index
      %48 = vector.load %arg8[%47, %c0_25] : memref<40x128xf32, #tpu.memory_space<vmem>>, vector<1x128xf32>
      %49 = arith.addf %44, %48 : vector<1x128xf32>
      %cst_26 = arith.constant 0.000000e+00 : f32
      %50 = vector.broadcast %cst_26 : f32 to vector<1x128xf32>
      %51 = arith.maximumf %49, %50 : vector<1x128xf32>
      %52 = arith.index_cast %42 : i32 to index
      %c0_27 = arith.constant 0 : index
      %53 = vector.load %arg9[%52, %c0_27] : memref<24x128xf32, #tpu.memory_space<vmem>>, vector<1x128xf32>
      %54 = arith.addf %53, %51 : vector<1x128xf32>
      %55 = arith.index_cast %42 : i32 to index
      %c0_28 = arith.constant 0 : index
      %56 = vector.load %arg9[%55, %c0_28] : memref<24x128xf32, #tpu.memory_space<vmem>>, vector<1x128xf32>
      tpu.vector_store %arg9[%55, %c0_28], %54 {strides = array<i32>} : memref<24x128xf32, #tpu.memory_space<vmem>>, vector<1x128xf32>,
      %c8_i32_29 = arith.constant 8 : i32
      %57 = arith.muli %arg10, %c8_i32_29 : i32
      %58 = arith.addi %10, %57 : i32
      %c2_i32 = arith.constant 2 : i32
      %59 = arith.addi %58, %c2_i32 : i32
      %60 = arith.index_cast %59 : i32 to index
      %61 = memref.load %arg1[%60] : memref<40xi32, #tpu.memory_space<smem>>
      %62 = arith.index_cast %59 : i32 to index
      %63 = memref.load %arg2[%62] : memref<40xi32, #tpu.memory_space<smem>>
      %64 = arith.index_cast %61 : i32 to index
      %c0_30 = arith.constant 0 : index
      %65 = vector.load %arg3[%64, %c0_30] : memref<16x128xf32, #tpu.memory_space<vmem>>, vector<1x128xf32>
      %c8_i32_31 = arith.constant 8 : i32
      %66 = arith.muli %arg10, %c8_i32_31 : i32
      %c2_i32_32 = arith.constant 2 : i32
      %67 = arith.addi %66, %c2_i32_32 : i32
      %68 = arith.index_cast %67 : i32 to index
      %c0_33 = arith.constant 0 : index
      %69 = vector.load %arg8[%68, %c0_33] : memref<40x128xf32, #tpu.memory_space<vmem>>, vector<1x128xf32>
      %70 = arith.addf %65, %69 : vector<1x128xf32>
      %cst_34 = arith.constant 0.000000e+00 : f32
      %71 = vector.broadcast %cst_34 : f32 to vector<1x128xf32>
      %72 = arith.maximumf %70, %71 : vector<1x128xf32>
      %73 = arith.index_cast %63 : i32 to index
      %c0_35 = arith.constant 0 : index
      %74 = vector.load %arg9[%73, %c0_35] : memref<24x128xf32, #tpu.memory_space<vmem>>, vector<1x128xf32>
      %75 = arith.addf %74, %72 : vector<1x128xf32>
      %76 = arith.index_cast %63 : i32 to index
      %c0_36 = arith.constant 0 : index
      %77 = vector.load %arg9[%76, %c0_36] : memref<24x128xf32, #tpu.memory_space<vmem>>, vector<1x128xf32>
      tpu.vector_store %arg9[%76, %c0_36], %75 {strides = array<i32>} : memref<24x128xf32, #tpu.memory_space<vmem>>, vector<1x128xf32>,
      %c8_i32_37 = arith.constant 8 : i32
      %78 = arith.muli %arg10, %c8_i32_37 : i32
      %79 = arith.addi %10, %78 : i32
      %c3_i32 = arith.constant 3 : i32
      %80 = arith.addi %79, %c3_i32 : i32
      %81 = arith.index_cast %80 : i32 to index
      %82 = memref.load %arg1[%81] : memref<40xi32, #tpu.memory_space<smem>>
      %83 = arith.index_cast %80 : i32 to index
      %84 = memref.load %arg2[%83] : memref<40xi32, #tpu.memory_space<smem>>
      %85 = arith.index_cast %82 : i32 to index
      %c0_38 = arith.constant 0 : index
      %86 = vector.load %arg3[%85, %c0_38] : memref<16x128xf32, #tpu.memory_space<vmem>>, vector<1x128xf32>
      %c8_i32_39 = arith.constant 8 : i32
      %87 = arith.muli %arg10, %c8_i32_39 : i32
      %c3_i32_40 = arith.constant 3 : i32
      %88 = arith.addi %87, %c3_i32_40 : i32
      %89 = arith.index_cast %88 : i32 to index
      %c0_41 = arith.constant 0 : index
      %90 = vector.load %arg8[%89, %c0_41] : memref<40x128xf32, #tpu.memory_space<vmem>>, vector<1x128xf32>
      %91 = arith.addf %86, %90 : vector<1x128xf32>
      %cst_42 = arith.constant 0.000000e+00 : f32
      %92 = vector.broadcast %cst_42 : f32 to vector<1x128xf32>
      %93 = arith.maximumf %91, %92 : vector<1x128xf32>
      %94 = arith.index_cast %84 : i32 to index
      %c0_43 = arith.constant 0 : index
      %95 = vector.load %arg9[%94, %c0_43] : memref<24x128xf32, #tpu.memory_space<vmem>>, vector<1x128xf32>
      %96 = arith.addf %95, %93 : vector<1x128xf32>
      %97 = arith.index_cast %84 : i32 to index
      %c0_44 = arith.constant 0 : index
      %98 = vector.load %arg9[%97, %c0_44] : memref<24x128xf32, #tpu.memory_space<vmem>>, vector<1x128xf32>
      tpu.vector_store %arg9[%97, %c0_44], %96 {strides = array<i32>} : memref<24x128xf32, #tpu.memory_space<vmem>>, vector<1x128xf32>,
      %c8_i32_45 = arith.constant 8 : i32
      %99 = arith.muli %arg10, %c8_i32_45 : i32
      %100 = arith.addi %10, %99 : i32
      %c4_i32 = arith.constant 4 : i32
      %101 = arith.addi %100, %c4_i32 : i32
      %102 = arith.index_cast %101 : i32 to index
      %103 = memref.load %arg1[%102] : memref<40xi32, #tpu.memory_space<smem>>
      %104 = arith.index_cast %101 : i32 to index
      %105 = memref.load %arg2[%104] : memref<40xi32, #tpu.memory_space<smem>>
      %106 = arith.index_cast %103 : i32 to index
      %c0_46 = arith.constant 0 : index
      %107 = vector.load %arg3[%106, %c0_46] : memref<16x128xf32, #tpu.memory_space<vmem>>, vector<1x128xf32>
      %c8_i32_47 = arith.constant 8 : i32
      %108 = arith.muli %arg10, %c8_i32_47 : i32
      %c4_i32_48 = arith.constant 4 : i32
      %109 = arith.addi %108, %c4_i32_48 : i32
      %110 = arith.index_cast %109 : i32 to index
      %c0_49 = arith.constant 0 : index
      %111 = vector.load %arg8[%110, %c0_49] : memref<40x128xf32, #tpu.memory_space<vmem>>, vector<1x128xf32>
      %112 = arith.addf %107, %111 : vector<1x128xf32>
      %cst_50 = arith.constant 0.000000e+00 : f32
      %113 = vector.broadcast %cst_50 : f32 to vector<1x128xf32>
      %114 = arith.maximumf %112, %113 : vector<1x128xf32>
      %115 = arith.index_cast %105 : i32 to index
      %c0_51 = arith.constant 0 : index
      %116 = vector.load %arg9[%115, %c0_51] : memref<24x128xf32, #tpu.memory_space<vmem>>, vector<1x128xf32>
      %117 = arith.addf %116, %114 : vector<1x128xf32>
      %118 = arith.index_cast %105 : i32 to index
      %c0_52 = arith.constant 0 : index
      %119 = vector.load %arg9[%118, %c0_52] : memref<24x128xf32, #tpu.memory_space<vmem>>, vector<1x128xf32>
      tpu.vector_store %arg9[%118, %c0_52], %117 {strides = array<i32>} : memref<24x128xf32, #tpu.memory_space<vmem>>, vector<1x128xf32>,
      %c8_i32_53 = arith.constant 8 : i32
      %120 = arith.muli %arg10, %c8_i32_53 : i32
      %121 = arith.addi %10, %120 : i32
      %c5_i32_54 = arith.constant 5 : i32
      %122 = arith.addi %121, %c5_i32_54 : i32
      %123 = arith.index_cast %122 : i32 to index
      %124 = memref.load %arg1[%123] : memref<40xi32, #tpu.memory_space<smem>>
      %125 = arith.index_cast %122 : i32 to index
      %126 = memref.load %arg2[%125] : memref<40xi32, #tpu.memory_space<smem>>
      %127 = arith.index_cast %124 : i32 to index
      %c0_55 = arith.constant 0 : index
      %128 = vector.load %arg3[%127, %c0_55] : memref<16x128xf32, #tpu.memory_space<vmem>>, vector<1x128xf32>
      %c8_i32_56 = arith.constant 8 : i32
      %129 = arith.muli %arg10, %c8_i32_56 : i32
      %c5_i32_57 = arith.constant 5 : i32
      %130 = arith.addi %129, %c5_i32_57 : i32
      %131 = arith.index_cast %130 : i32 to index
      %c0_58 = arith.constant 0 : index
      %132 = vector.load %arg8[%131, %c0_58] : memref<40x128xf32, #tpu.memory_space<vmem>>, vector<1x128xf32>
      %133 = arith.addf %128, %132 : vector<1x128xf32>
      %cst_59 = arith.constant 0.000000e+00 : f32
      %134 = vector.broadcast %cst_59 : f32 to vector<1x128xf32>
      %135 = arith.maximumf %133, %134 : vector<1x128xf32>
      %136 = arith.index_cast %126 : i32 to index
      %c0_60 = arith.constant 0 : index
      %137 = vector.load %arg9[%136, %c0_60] : memref<24x128xf32, #tpu.memory_space<vmem>>, vector<1x128xf32>
      %138 = arith.addf %137, %135 : vector<1x128xf32>
      %139 = arith.index_cast %126 : i32 to index
      %c0_61 = arith.constant 0 : index
      %140 = vector.load %arg9[%139, %c0_61] : memref<24x128xf32, #tpu.memory_space<vmem>>, vector<1x128xf32>
      tpu.vector_store %arg9[%139, %c0_61], %138 {strides = array<i32>} : memref<24x128xf32, #tpu.memory_space<vmem>>, vector<1x128xf32>,
      %c8_i32_62 = arith.constant 8 : i32
      %141 = arith.muli %arg10, %c8_i32_62 : i32
      %142 = arith.addi %10, %141 : i32
      %c6_i32 = arith.constant 6 : i32
      %143 = arith.addi %142, %c6_i32 : i32
      %144 = arith.index_cast %143 : i32 to index
      %145 = memref.load %arg1[%144] : memref<40xi32, #tpu.memory_space<smem>>
      %146 = arith.index_cast %143 : i32 to index
      %147 = memref.load %arg2[%146] : memref<40xi32, #tpu.memory_space<smem>>
      %148 = arith.index_cast %145 : i32 to index
      %c0_63 = arith.constant 0 : index
      %149 = vector.load %arg3[%148, %c0_63] : memref<16x128xf32, #tpu.memory_space<vmem>>, vector<1x128xf32>
      %c8_i32_64 = arith.constant 8 : i32
      %150 = arith.muli %arg10, %c8_i32_64 : i32
      %c6_i32_65 = arith.constant 6 : i32
      %151 = arith.addi %150, %c6_i32_65 : i32
      %152 = arith.index_cast %151 : i32 to index
      %c0_66 = arith.constant 0 : index
      %153 = vector.load %arg8[%152, %c0_66] : memref<40x128xf32, #tpu.memory_space<vmem>>, vector<1x128xf32>
      %154 = arith.addf %149, %153 : vector<1x128xf32>
      %cst_67 = arith.constant 0.000000e+00 : f32
      %155 = vector.broadcast %cst_67 : f32 to vector<1x128xf32>
      %156 = arith.maximumf %154, %155 : vector<1x128xf32>
      %157 = arith.index_cast %147 : i32 to index
      %c0_68 = arith.constant 0 : index
      %158 = vector.load %arg9[%157, %c0_68] : memref<24x128xf32, #tpu.memory_space<vmem>>, vector<1x128xf32>
      %159 = arith.addf %158, %156 : vector<1x128xf32>
      %160 = arith.index_cast %147 : i32 to index
      %c0_69 = arith.constant 0 : index
      %161 = vector.load %arg9[%160, %c0_69] : memref<24x128xf32, #tpu.memory_space<vmem>>, vector<1x128xf32>
      tpu.vector_store %arg9[%160, %c0_69], %159 {strides = array<i32>} : memref<24x128xf32, #tpu.memory_space<vmem>>, vector<1x128xf32>,
      %c8_i32_70 = arith.constant 8 : i32
      %162 = arith.muli %arg10, %c8_i32_70 : i32
      %163 = arith.addi %10, %162 : i32
      %c7_i32 = arith.constant 7 : i32
      %164 = arith.addi %163, %c7_i32 : i32
      %165 = arith.index_cast %164 : i32 to index
      %166 = memref.load %arg1[%165] : memref<40xi32, #tpu.memory_space<smem>>
      %167 = arith.index_cast %164 : i32 to index
      %168 = memref.load %arg2[%167] : memref<40xi32, #tpu.memory_space<smem>>
      %169 = arith.index_cast %166 : i32 to index
      %c0_71 = arith.constant 0 : index
      %170 = vector.load %arg3[%169, %c0_71] : memref<16x128xf32, #tpu.memory_space<vmem>>, vector<1x128xf32>
      %c8_i32_72 = arith.constant 8 : i32
      %171 = arith.muli %arg10, %c8_i32_72 : i32
      %c7_i32_73 = arith.constant 7 : i32
      %172 = arith.addi %171, %c7_i32_73 : i32
      %173 = arith.index_cast %172 : i32 to index
      %c0_74 = arith.constant 0 : index
      %174 = vector.load %arg8[%173, %c0_74] : memref<40x128xf32, #tpu.memory_space<vmem>>, vector<1x128xf32>
      %175 = arith.addf %170, %174 : vector<1x128xf32>
      %cst_75 = arith.constant 0.000000e+00 : f32
      %176 = vector.broadcast %cst_75 : f32 to vector<1x128xf32>
      %177 = arith.maximumf %175, %176 : vector<1x128xf32>
      %178 = arith.index_cast %168 : i32 to index
      %c0_76 = arith.constant 0 : index
      %179 = vector.load %arg9[%178, %c0_76] : memref<24x128xf32, #tpu.memory_space<vmem>>, vector<1x128xf32>
      %180 = arith.addf %179, %177 : vector<1x128xf32>
      %181 = arith.index_cast %168 : i32 to index
      %c0_77 = arith.constant 0 : index
      %182 = vector.load %arg9[%181, %c0_77] : memref<24x128xf32, #tpu.memory_space<vmem>>, vector<1x128xf32>
      tpu.vector_store %arg9[%181, %c0_77], %180 {strides = array<i32>} : memref<24x128xf32, #tpu.memory_space<vmem>>, vector<1x128xf32>,
    }
    %c5_i32_9 = arith.constant 5 : i32
    %c0_i32_10 = arith.constant 0 : i32
    %12 = arith.cmpi eq, %arg0, %c0_i32_10 : i32
    %13 = arith.extui %12 : i1 to i32
    %c0_i32_11 = arith.constant 0 : i32
    %14 = arith.cmpi ne, %13, %c0_i32_11 : i32
    scf.if %14 {
      %c0_12 = arith.constant 0 : index
      %c0_13 = arith.constant 0 : index
      %15 = vector.load %arg3[%c0_12, %c0_13] : memref<16x128xf32, #tpu.memory_space<vmem>>, vector<16x128xf32>
      %c0_14 = arith.constant 0 : index
      %c0_15 = arith.constant 0 : index
      %16 = vector.load %arg9[%c0_14, %c0_15] : memref<24x128xf32, #tpu.memory_space<vmem>>, vector<16x128xf32>
      %17 = arith.addf %15, %16 : vector<16x128xf32>
      %18 = arith.truncf %17 : vector<16x128xf32> to vector<16x128xbf16>
      %c0_16 = arith.constant 0 : index
      %c0_17 = arith.constant 0 : index
      %19 = vector.load %arg7[%c0_16, %c0_17] : memref<16x128xbf16, #tpu.memory_space<vmem>>, vector<16x128xbf16>
      tpu.vector_store %arg7[%c0_16, %c0_17], %18 {strides = array<i32>} : memref<16x128xbf16, #tpu.memory_space<vmem>>, vector<16x128xbf16>,
    } else {
    }
    return
  }
  func.func @transform_0(%arg0: i32, %arg1: memref<40xi32, #tpu.memory_space<smem>>, %arg2: memref<40xi32, #tpu.memory_space<smem>>) -> (i32, i32) {
    %c0_i32 = arith.constant 0 : i32
    %c0_i32_0 = arith.constant 0 : i32
    %c0_i32_1 = arith.constant 0 : i32
    return %c0_i32, %c0_i32_0 : i32, i32
  }
  func.func @transform_1(%arg0: i32, %arg1: memref<40xi32, #tpu.memory_space<smem>>, %arg2: memref<40xi32, #tpu.memory_space<smem>>) -> (i32, i32) {
    %c0_i32 = arith.constant 0 : i32
    %c0_i32_0 = arith.constant 0 : i32
    return %arg0, %c0_i32 : i32, i32
  }
  func.func @transform_2(%arg0: i32, %arg1: memref<40xi32, #tpu.memory_space<smem>>, %arg2: memref<40xi32, #tpu.memory_space<smem>>) -> (i32, i32) {
    %c0_i32 = arith.constant 0 : i32
    %c0_i32_0 = arith.constant 0 : i32
    %c0_i32_1 = arith.constant 0 : i32
    return %c0_i32, %c0_i32_0 : i32, i32
  }
  func.func @transform_3(%arg0: i32, %arg1: memref<40xi32, #tpu.memory_space<smem>>, %arg2: memref<40xi32, #tpu.memory_space<smem>>) -> (i32, i32) {
    %c0_i32 = arith.constant 0 : i32
    %c0_i32_0 = arith.constant 0 : i32
    %c0_i32_1 = arith.constant 0 : i32
    return %c0_i32, %c0_i32_0 : i32, i32
  }
  func.func @transform_4(%arg0: i32, %arg1: memref<40xi32, #tpu.memory_space<smem>>, %arg2: memref<40xi32, #tpu.memory_space<smem>>) -> (i32, i32) {
    %c0_i32 = arith.constant 0 : i32
    %c0_i32_0 = arith.constant 0 : i32
    %c0_i32_1 = arith.constant 0 : i32
    return %c0_i32, %c0_i32_0 : i32, i32
  }
}

</mosaic_0001>

<llo_original>
// kernel: tpu_custom_call.1
$region0: #{tpu_custom_call.1}
  #allocation0 [shape = 'u32[]', space=smem, size = 0x4, offset = 0x4, fixed_abs, tag = 'smem constant byte address 0x4 - core index']
  #allocation1 [shape = 'u32[144,128]{1,0:T(1,128)}', space=vmem, size = 0x12000, scoped, tag = 'internal scratch']
  #allocation2 [shape = 'f32[40,128]{1,0:T(8,128)}', space=vmem, size = 0x5000, scoped, tag = 'scratch operand']
  #allocation3 [shape = 'f32[24,128]{1,0:T(8,128)}', space=vmem, size = 0x3000, scoped, tag = 'scratch operand']
  #allocation4 [shape = 's32[1]{0}', space=sflag, size = 0x4, scoped, tag = 'scoped memory for tpu_custom_call.1']
  #allocation5 [shape = 'u8[512]{0}', space=smem, size = 0x200, scoped, tag = 'prefetched SMEM operand 0']
  #allocation6 [shape = 'u8[512]{0}', space=smem, size = 0x200, scoped, tag = 'prefetched SMEM operand 1']
  %s0 = inlined_call_operand.hbm [shape: s32[40], index: 0, kind: input, shape index: {}]
  %s1 = inlined_call_operand.vmem [shape: s32[40], index: 1, kind: input, shape index: {}]
  %s2 = inlined_call_operand.hbm [shape: f32[16,128], index: 2, kind: input, shape index: {}]
  %s3 = inlined_call_operand.hbm [shape: bf16[40,128], index: 3, kind: input, shape index: {}]
  %s4 = inlined_call_operand.hbm [shape: bf16[128,128], index: 4, kind: input, shape index: {}]
  %s5 = inlined_call_operand.vmem [shape: f32[1,128], index: 5, kind: input, shape index: {}]
  %s6 = inlined_call_operand.hbm [shape: bf16[16,128], index: 6, kind: output, shape index: {}]
  %s7 = sld [smem:[#allocation0]]
  $region53: #{tpu_custom_call.1} parent=0
    _
  %s9 = ssub.s32 1, %s7
  %s10 = scalar_select 0, %s9, %s7
  %12 = dma.hbm_to_smem %s0, 16, [#allocation5], [#allocation4]
  %s13 = sshll.u32 %s1, 4
  %s14 = int_to_ptr.vmem [resolvable:$true] %s13
  %16 = dma.vmem_to_smem %s14, 16, [#allocation6], [#allocation4]
  %17 = dma.done [#allocation4], 32
  %18 = sfence
  $region1: #{tpu_custom_call.1} parent=0
    #allocation7 [shape = 'u8[8192]{0}', space=vmem, size = 0x2000, scoped, tag = 'input window, operand 2, single buffered']
    #allocation8 [shape = 's32[1]{0}', space=sflag, size = 0x4, scoped, tag = 'scoped memory for tpu_custom_call.1']
    #allocation9 [shape = 's32[1]{0}', space=sflag, size = 0x4, scoped, tag = 'scoped memory for tpu_custom_call.1']
    #allocation10 [shape = 'u8[10240]{0}', space=vmem, size = 0x2800, scoped, tag = 'input window, operand 3, single buffered']
    #allocation11 [shape = 's32[1]{0}', space=sflag, size = 0x4, scoped, tag = 'scoped memory for tpu_custom_call.1']
    #allocation12 [shape = 'u8[32768]{0}', space=vmem, size = 0x8000, scoped, tag = 'input window, operand 4, single buffered']
    #allocation13 [shape = 'u8[4096]{0}', space=vmem, size = 0x1000, scoped, tag = 'output window, operand 0, single buffered']
    %19 = vsyncpa [#allocation8], 0
    %20 = vsyncpa [#allocation11], 0
    %21 = vsyncpa [#allocation9], 0
    // Predicated region
    $region2: #{tpu_custom_call.1} parent=1 // pred_check
      _
    $region3: #{tpu_custom_call.1} parent=1 // pred_check_branch
      %23 = sbr.rel (0) target = $region5
    $region4: #{tpu_custom_call.1} parent=1 // pred_region
      %s25 = ssub.s32 256, 256
      %26 = vsyncadd [#allocation8], %s25
      %s27 = sshll.u32 [#allocation7], 4
      %s28 = int_to_ptr.vmem [resolvable:$true] %s27
      %33 = dma.hbm_to_vmem [thread:$0]  %s2, 256, %s28, [#allocation8], 128, 128, 8
    $region5: #{tpu_custom_call.1} parent=1 // pred_fallthru
      _
    // Predicated region
    $region6: #{tpu_custom_call.1} parent=1 // pred_check
      _
    $region7: #{tpu_custom_call.1} parent=1 // pred_check_branch
      %35 = sbr.rel (0) target = $region9
    $region8: #{tpu_custom_call.1} parent=1 // pred_region
      %s37 = ssub.s32 320, 320
      %38 = vsyncadd [#allocation11], %s37
      %s39 = sshll.u32 [#allocation10], 4
      %s40 = int_to_ptr.vmem [resolvable:$true] %s39
      %45 = dma.hbm_to_vmem [thread:$0]  %s3, 320, %s40, [#allocation11], 64, 64, 4
    $region9: #{tpu_custom_call.1} parent=1 // pred_fallthru
      _
    // Predicated region
    $region10: #{tpu_custom_call.1} parent=1 // pred_check
      _
    $region11: #{tpu_custom_call.1} parent=1 // pred_check_branch
      %47 = sbr.rel (0) target = $region13
    $region12: #{tpu_custom_call.1} parent=1 // pred_region
      %s49 = ssub.s32 1024, 1024
      %50 = vsyncadd [#allocation11], %s49
      %s51 = sshll.u32 [#allocation12], 4
      %s52 = int_to_ptr.vmem [resolvable:$true] %s51
      %57 = dma.hbm_to_vmem [thread:$0]  %s4, 1024, %s52, [#allocation11], 64, 64, 4
    $region13: #{tpu_custom_call.1} parent=1 // pred_fallthru
      _
    // Predicated region
    $region14: #{tpu_custom_call.1} parent=1 // pred_check
      _
    $region15: #{tpu_custom_call.1} parent=1 // pred_check_branch
      %59 = sbr.rel (0) target = $region17
    $region16: #{tpu_custom_call.1} parent=1 // pred_region
      _
    $region17: #{tpu_custom_call.1} parent=1 // pred_fallthru
      _
    // Predicated region
    $region18: #{tpu_custom_call.1} parent=1 // pred_check
      _
    $region19: #{tpu_custom_call.1} parent=1 // pred_check_branch
      %61 = sbr.rel (0) target = $region21
    $region20: #{tpu_custom_call.1} parent=1 // pred_region
      %62 = dma.done [#allocation8], 256
    $region21: #{tpu_custom_call.1} parent=1 // pred_fallthru
      _
    // Predicated region
    $region22: #{tpu_custom_call.1} parent=1 // pred_check
      _
    $region23: #{tpu_custom_call.1} parent=1 // pred_check_branch
      %64 = sbr.rel (0) target = $region25
    $region24: #{tpu_custom_call.1} parent=1 // pred_region
      %65 = dma.done [#allocation11], 320
    $region25: #{tpu_custom_call.1} parent=1 // pred_fallthru
      _
    // Predicated region
    $region26: #{tpu_custom_call.1} parent=1 // pred_check
      _
    $region27: #{tpu_custom_call.1} parent=1 // pred_check_branch
      %67 = sbr.rel (0) target = $region29
    $region28: #{tpu_custom_call.1} parent=1 // pred_region
      %68 = dma.done [#allocation11], 1024
    $region29: #{tpu_custom_call.1} parent=1 // pred_fallthru
      _
    %p70 = scmp.eq.s32.totalorder 0, 0
    // Predicated region
    $region30: #{tpu_custom_call.1} parent=1 // pred_check
      %p71 = pneg %p70
    $region31: #{tpu_custom_call.1} parent=1 // pred_check_branch
      %73 = sbr.rel (%p71) target = $region33
    $region32: #{tpu_custom_call.1} parent=1 // pred_region
      %74 = vst [vmem:[#allocation3] sm:$0xff] 0.0
      %75 = vst [vmem:[#allocation3 + $0x8] sm:$0xff] 0.0
      %76 = vst [vmem:[#allocation3 + $0x10] sm:$0xff] 0.0
    $region33: #{tpu_custom_call.1} parent=1 // pred_fallthru
      _
    %v77 = vld [vmem:[#allocation10] sm:$0xf]
    %v78 = vld [vmem:[#allocation10 + $0x4] sm:$0xf]
    %v79 = vld [vmem:[#allocation10 + $0x8] sm:$0xf]
    %v80 = vld [vmem:[#allocation10 + $0xc] sm:$0xf]
    %v81 = vld [vmem:[#allocation10 + $0x10] sm:$0xf]
    %v82 = vld [vmem:[#allocation12] sm:$0xf]
    %v83 = vld [vmem:[#allocation12 + $0x4] sm:$0xf]
    %v84 = vld [vmem:[#allocation12 + $0x8] sm:$0xf]
    %v85 = vld [vmem:[#allocation12 + $0xc] sm:$0xf]
    %v86 = vld [vmem:[#allocation12 + $0x10] sm:$0xf]
    %v87 = vld [vmem:[#allocation12 + $0x14] sm:$0xf]
    %v88 = vld [vmem:[#allocation12 + $0x18] sm:$0xf]
    %v89 = vld [vmem:[#allocation12 + $0x1c] sm:$0xf]
    %v90 = vld [vmem:[#allocation12 + $0x20] sm:$0xf]
    %v91 = vld [vmem:[#allocation12 + $0x24] sm:$0xf]
    %v92 = vld [vmem:[#allocation12 + $0x28] sm:$0xf]
    %v93 = vld [vmem:[#allocation12 + $0x2c] sm:$0xf]
    %v94 = vld [vmem:[#allocation12 + $0x30] sm:$0xf]
    %v95 = vld [vmem:[#allocation12 + $0x34] sm:$0xf]
    %v96 = vld [vmem:[#allocation12 + $0x38] sm:$0xf]
    %v97 = vld [vmem:[#allocation12 + $0x3c] sm:$0xf]
    %v98 = vld [vmem:[%s5] sm:$0x1]
    %v100 = vlaneseq
    %v101 = vshrl.u32 %v100, 7
    %v102 = vsub.s32 0, %v101
    %v103 = vrot.slane %v98, %v102
    %v110 = vunpack.c.l.b16 %v77
    %v111 = vunpack.c.l.b16 %v78
    %v112 = vunpack.c.l.b16 %v79
    %v113 = vunpack.c.l.b16 %v80
    %v114 = vunpack.c.l.b16 %v81
    %v115 = vpack.c.b16 %v111, %v110
    %v116 = vpack.c.b16 %v113, %v112
    %v117 = vpack.c.b16 %v114, %v114
    %v137 = vunpack.c.l.b16 %v82
    %v138 = vunpack.c.l.b16 %v83
    %v139 = vunpack.c.l.b16 %v84
    %v140 = vunpack.c.l.b16 %v85
    %v141 = vunpack.c.l.b16 %v86
    %v142 = vunpack.c.l.b16 %v87
    %v143 = vunpack.c.l.b16 %v88
    %v144 = vunpack.c.l.b16 %v89
    %v145 = vunpack.c.l.b16 %v90
    %v146 = vunpack.c.l.b16 %v91
    %v147 = vunpack.c.l.b16 %v92
    %v148 = vunpack.c.l.b16 %v93
    %v149 = vunpack.c.l.b16 %v94
    %v150 = vunpack.c.l.b16 %v95
    %v151 = vunpack.c.l.b16 %v96
    %v152 = vunpack.c.l.b16 %v97
    %v153 = vpack.c.b16 %v138, %v137
    %v154 = vpack.c.b16 %v140, %v139
    %v155 = vpack.c.b16 %v142, %v141
    %v156 = vpack.c.b16 %v144, %v143
    %v157 = vpack.c.b16 %v146, %v145
    %v158 = vpack.c.b16 %v148, %v147
    %v159 = vpack.c.b16 %v150, %v149
    %v160 = vpack.c.b16 %v152, %v151
    %169 = vmatprep.subr.bf16.mxu0 0
    %170 = vmatpush1.bf16.msra.mxu0 %v160
    %171 = vmatprep.subr.bf16.mxu0 0
    %172 = vmatpush1.bf16.msra.mxu0 %v159
    %173 = vmatprep.subr.bf16.mxu0 0
    %174 = vmatpush1.bf16.msra.mxu0 %v158
    %175 = vmatprep.subr.bf16.mxu0 0
    %176 = vmatpush1.bf16.msra.mxu0 %v157
    %177 = vmatprep.subr.bf16.mxu0 0
    %178 = vmatpush1.bf16.msra.mxu0 %v156
    %179 = vmatprep.subr.bf16.mxu0 0
    %180 = vmatpush1.bf16.msra.mxu0 %v155
    %181 = vmatprep.subr.bf16.mxu0 0
    %182 = vmatpush1.bf16.msra.mxu0 %v154
    %183 = vmatprep.subr.bf16.mxu0 0
    %184 = vmatpush1.bf16.msra.mxu0 %v153
    %185 = vmatprep.subr.bf16.mxu0 0
    %186 = vmatpush2.bf16.msra.mxu0 0
    %187 = vmatprep.subr.bf16.mxu0 0
    %188 = vmatpush2.bf16.msra.mxu0 0
    %189 = vmatprep.subr.bf16.mxu0 0
    %190 = vmatpush2.bf16.msra.mxu0 0
    %191 = vmatprep.subr.bf16.mxu0 0
    %192 = vmatpush2.bf16.msra.mxu0 0
    %193 = vmatprep.subr.bf16.mxu0 0
    %194 = vmatpush2.bf16.msra.mxu0 0
    %195 = vmatprep.subr.bf16.mxu0 0
    %196 = vmatpush2.bf16.msra.mxu0 0
    %197 = vmatprep.subr.bf16.mxu0 0
    %198 = vmatpush2.bf16.msra.mxu0 0
    %199 = vmatprep.subr.bf16.mxu0 0
    %200 = vmatpush2.bf16.msra.mxu0 0
    %201 = vmatprep.mubr.bf16.mxu0 0
    %202 = vmatmul.mubr.bf16.gmra.mxu0 %v115
    %v203 = vpop.f32.mrf.mxu0
    %v204 = vadd.f32 %v103, %v203
    %v205 = vpop.f32.mrf.mxu0
    %v206 = vpop.f32.mrf.mxu0
    %v207 = vadd.f32 %v103, %v206
    %v208 = vpop.f32.mrf.mxu0
    %209 = vmatprep.mubr.bf16.mxu0 0
    %210 = vmatmul.mubr.bf16.gmra.mxu0 %v116
    %v211 = vpop.f32.mrf.mxu0
    %v212 = vadd.f32 %v103, %v211
    %v213 = vpop.f32.mrf.mxu0
    %v214 = vpop.f32.mrf.mxu0
    %v215 = vadd.f32 %v103, %v214
    %v216 = vpop.f32.mrf.mxu0
    %217 = vmatprep.mubr.bf16.mxu0 0
    %218 = vmatmul.mubr.bf16.gmra.mxu0 %v117
    %v219 = vpop.f32.mrf.mxu0
    %v220 = vadd.f32 %v103, %v219
    %v221 = vpop.f32.mrf.mxu0
    %v222 = vpop.f32.mrf.mxu0
    %v223 = vpop.f32.mrf.mxu0
    %224 = vdwg.mxu0
    %225 = vst [vmem:[#allocation2] sm:$0xff] %v204
    %226 = vst [vmem:[#allocation2 + $0x8] sm:$0xff] %v207
    %227 = vst [vmem:[#allocation2 + $0x10] sm:$0xff] %v212
    %228 = vst [vmem:[#allocation2 + $0x18] sm:$0xff] %v215
    %229 = vst [vmem:[#allocation2 + $0x20] sm:$0xff] %v220
    %s230 = smul.u32 0, 40
    loop: start=0, step=1, limit=5
    $region34: #{tpu_custom_call.1} parent=1 // loop_pre_header
      _
    $region35: #{tpu_custom_call.1} parent=1 // loop_header
      %s232 = sphi 0, %s236
      %p233 = scmp.ge.s32.totalorder %s232, 5
    $region36: #{tpu_custom_call.1} parent=1 // loop_header_branch
      %235 = sbr.rel (%p233) target = $region40
    $region37: #{tpu_custom_call.1} parent=1 // loop_body
      %s237 = smul.u32 %s232, 8
      %s238 = sadd.s32 %s230, %s237
      %s239 = sld [smem:[#allocation5 + %s238]]
      %s240 = sld [smem:[#allocation6 + %s238]]
      %s241 = scalar_lea.vmem [#allocation7], %s239
      %v242 = vld [vmem:[%s241] sm:$0x1]
      %s243 = scalar_lea.vmem [#allocation2], %s237
      %v244 = vld [vmem:[%s243] sm:$0x1]
      %v245 = vadd.f32 %v242, %v244
      %v246 = vmax.f32 %v245, 0.0
      %s247 = scalar_lea.vmem [#allocation3], %s240
      %v248 = vld [vmem:[%s247] sm:$0x1]
      %v249 = vadd.f32 %v248, %v246
      %250 = vst [vmem:[%s247] sm:$0x1] %v249
      %s251 = sadd.s32 %s238, 1
      %s252 = sld [smem:[#allocation5 + %s251]]
      %s253 = sld [smem:[#allocation6 + %s251]]
      %s254 = scalar_lea.vmem [#allocation7], %s252
      %v255 = vld [vmem:[%s254] sm:$0x1]
      %s256 = sadd.s32 %s237, 1
      %s257 = scalar_lea.vmem [#allocation2], %s256
      %v258 = vld [vmem:[%s257] sm:$0x1]
      %v259 = vadd.f32 %v255, %v258
      %v260 = vmax.f32 %v259, 0.0
      %s261 = scalar_lea.vmem [#allocation3], %s253
      %v262 = vld [vmem:[%s261] sm:$0x1]
      %v263 = vadd.f32 %v262, %v260
      %264 = vst [vmem:[%s261] sm:$0x1] %v263
      %s265 = sadd.s32 %s238, 2
      %s266 = sld [smem:[#allocation5 + %s265]]
      %s267 = sld [smem:[#allocation6 + %s265]]
      %s268 = scalar_lea.vmem [#allocation7], %s266
      %v269 = vld [vmem:[%s268] sm:$0x1]
      %s270 = sadd.s32 %s237, 2
      %s271 = scalar_lea.vmem [#allocation2], %s270
      %v272 = vld [vmem:[%s271] sm:$0x1]
      %v273 = vadd.f32 %v269, %v272
      %v274 = vmax.f32 %v273, 0.0
      %s275 = scalar_lea.vmem [#allocation3], %s267
      %v276 = vld [vmem:[%s275] sm:$0x1]
      %v277 = vadd.f32 %v276, %v274
      %278 = vst [vmem:[%s275] sm:$0x1] %v277
      %s279 = sadd.s32 %s238, 3
      %s280 = sld [smem:[#allocation5 + %s279]]
      %s281 = sld [smem:[#allocation6 + %s279]]
      %s282 = scalar_lea.vmem [#allocation7], %s280
      %v283 = vld [vmem:[%s282] sm:$0x1]
      %s284 = sadd.s32 %s237, 3
      %s285 = scalar_lea.vmem [#allocation2], %s284
      %v286 = vld [vmem:[%s285] sm:$0x1]
      %v287 = vadd.f32 %v283, %v286
      %v288 = vmax.f32 %v287, 0.0
      %s289 = scalar_lea.vmem [#allocation3], %s281
      %v290 = vld [vmem:[%s289] sm:$0x1]
      %v291 = vadd.f32 %v290, %v288
      %292 = vst [vmem:[%s289] sm:$0x1] %v291
      %s293 = sadd.s32 %s238, 4
      %s294 = sld [smem:[#allocation5 + %s293]]
      %s295 = sld [smem:[#allocation6 + %s293]]
      %s296 = scalar_lea.vmem [#allocation7], %s294
      %v297 = vld [vmem:[%s296] sm:$0x1]
      %s298 = sadd.s32 %s237, 4
      %s299 = scalar_lea.vmem [#allocation2], %s298
      %v300 = vld [vmem:[%s299] sm:$0x1]
      %v301 = vadd.f32 %v297, %v300
      %v302 = vmax.f32 %v301, 0.0
      %s303 = scalar_lea.vmem [#allocation3], %s295
      %v304 = vld [vmem:[%s303] sm:$0x1]
      %v305 = vadd.f32 %v304, %v302
      %306 = vst [vmem:[%s303] sm:$0x1] %v305
      %s307 = sadd.s32 %s238, 5
      %s308 = sld [smem:[#allocation5 + %s307]]
      %s309 = sld [smem:[#allocation6 + %s307]]
      %s310 = scalar_lea.vmem [#allocation7], %s308
      %v311 = vld [vmem:[%s310] sm:$0x1]
      %s312 = sadd.s32 %s237, 5
      %s313 = scalar_lea.vmem [#allocation2], %s312
      %v314 = vld [vmem:[%s313] sm:$0x1]
      %v315 = vadd.f32 %v311, %v314
      %v316 = vmax.f32 %v315, 0.0
      %s317 = scalar_lea.vmem [#allocation3], %s309
      %v318 = vld [vmem:[%s317] sm:$0x1]
      %v319 = vadd.f32 %v318, %v316
      %320 = vst [vmem:[%s317] sm:$0x1] %v319
      %s321 = sadd.s32 %s238, 6
      %s322 = sld [smem:[#allocation5 + %s321]]
      %s323 = sld [smem:[#allocation6 + %s321]]
      %s324 = scalar_lea.vmem [#allocation7], %s322
      %v325 = vld [vmem:[%s324] sm:$0x1]
      %s326 = sadd.s32 %s237, 6
      %s327 = scalar_lea.vmem [#allocation2], %s326
      %v328 = vld [vmem:[%s327] sm:$0x1]
      %v329 = vadd.f32 %v325, %v328
      %v330 = vmax.f32 %v329, 0.0
      %s331 = scalar_lea.vmem [#allocation3], %s323
      %v332 = vld [vmem:[%s331] sm:$0x1]
      %v333 = vadd.f32 %v332, %v330
      %334 = vst [vmem:[%s331] sm:$0x1] %v333
      %s335 = sadd.s32 %s238, 7
      %s336 = sld [smem:[#allocation5 + %s335]]
      %s337 = sld [smem:[#allocation6 + %s335]]
      %s338 = scalar_lea.vmem [#allocation7], %s336
      %v339 = vld [vmem:[%s338] sm:$0x1]
      %s340 = sadd.s32 %s237, 7
      %s341 = scalar_lea.vmem [#allocation2], %s340
      %v342 = vld [vmem:[%s341] sm:$0x1]
      %v343 = vadd.f32 %v339, %v342
      %v344 = vmax.f32 %v343, 0.0
      %s345 = scalar_lea.vmem [#allocation3], %s337
      %v346 = vld [vmem:[%s345] sm:$0x1]
      %v347 = vadd.f32 %v346, %v344
      %348 = vst [vmem:[%s345] sm:$0x1] %v347
    $region38: #{tpu_custom_call.1} parent=1 // loop_footer
      %s236 = sadd.s32 1, %s232
    $region39: #{tpu_custom_call.1} parent=1 // loop_footer_branch
      %231 = sbr.rel target = $region35
    $region40: #{tpu_custom_call.1} parent=1 // loop_exit
      _
    // Predicated region
    $region41: #{tpu_custom_call.1} parent=1 // pred_check
      %p349 = pneg %p70
    $region42: #{tpu_custom_call.1} parent=1 // pred_check_branch
      %351 = sbr.rel (%p349) target = $region44
    $region43: #{tpu_custom_call.1} parent=1 // pred_region
      %v352 = vld [vmem:[#allocation7] sm:$0xff]
      %v353 = vld [vmem:[#allocation7 + $0x8] sm:$0xff]
      %v354 = vld [vmem:[#allocation3] sm:$0xff]
      %v355 = vld [vmem:[#allocation3 + $0x8] sm:$0xff]
      %v356 = vadd.f32 %v352, %v354
      %v357 = vadd.f32 %v353, %v355
      %v358 = vpack.c.bf16 %v357, %v356
      %v360 = vunpack.c.l.b16 %v358
      %v361 = vunpack.c.h.b16 %v358
      %v362 = vpack.c.b16 %v360, %v360
      %v363 = vpack.c.b16 %v361, %v361
      %366 = vst [vmem:[#allocation13] sm:$0xf] %v362
      %367 = vst [vmem:[#allocation13 + $0x4] sm:$0xf] %v363
    $region44: #{tpu_custom_call.1} parent=1 // pred_fallthru
      _
    // Predicated region
    $region45: #{tpu_custom_call.1} parent=1 // pred_check
      _
    $region46: #{tpu_custom_call.1} parent=1 // pred_check_branch
      %369 = sbr.rel (0) target = $region48
    $region47: #{tpu_custom_call.1} parent=1 // pred_region
      %s371 = ssub.s32 128, 128
      %372 = vsyncadd [#allocation9], %s371
      %s373 = sshll.u32 [#allocation13], 4
      %s374 = int_to_ptr.vmem [resolvable:$true] %s373
      %379 = dma.vmem_to_hbm [thread:$0]  %s374, 128, %s6, [#allocation9], 64, 64, 4
    $region48: #{tpu_custom_call.1} parent=1 // pred_fallthru
      _
    // Predicated region
    $region49: #{tpu_custom_call.1} parent=1 // pred_check
      _
    $region50: #{tpu_custom_call.1} parent=1 // pred_check_branch
      %381 = sbr.rel (0) target = $region52
    $region51: #{tpu_custom_call.1} parent=1 // pred_region
      %382 = dma.done [#allocation9], 128
    $region52: #{tpu_custom_call.1} parent=1 // pred_fallthru
      _
    %383 = vsyncpa [#allocation8], 1
    %384 = vsyncpa [#allocation11], 1
    %385 = vsyncpa [#allocation9], 1

</llo_original>
